<compile_context>
chip_gen: v6e
topology: v6e:2x2x1
jax: 0.10.0
libtpu: 0.0.40
codegen_flags: <defaults>
</compile_context>

<pallas_src>
import math
import jax
import jax.numpy as jnp
from jax.experimental import pallas as pl
from jax.experimental.pallas import tpu as pltpu

# ---- synthetic Gemma2 config (small) ----
SEQ_LEN = 8
HIDDEN = 32
NUM_HEADS = 4
HEAD_DIM = 16
NUM_KV_HEADS = 2
NUM_GROUPS = NUM_HEADS // NUM_KV_HEADS   # query heads per kv head
INTER = 64                               # intermediate_size
RMS_EPS = 1e-6
ROPE_THETA = 10000.0
QUERY_PRE_ATTN_SCALAR = HEAD_DIM
SCALING = QUERY_PRE_ATTN_SCALAR ** -0.5
SOFTCAP = 50.0                           # attn logit softcapping

Q_DIM = NUM_HEADS * HEAD_DIM             # 64
KV_DIM = NUM_KV_HEADS * HEAD_DIM         # 32
QKV_DIM = Q_DIM + 2 * KV_DIM             # 128 (lane-dense fused projection)
GELU_C = math.sqrt(2.0 / math.pi)


def decoder_layer_kernel(x_ref, wqkv_ref, wo_ref, wgu_ref, wd_ref,
                         g_in_ref, g_pa_ref, g_pf_ref, g_pff_ref,
                         cosq_ref, sinq_ref, cosk_ref, sink_ref, out_ref):
    f32 = jnp.float32
    bf16 = jnp.bfloat16
    half = HEAD_DIM // 2

    x = x_ref[...]                                   # [T, H] f32
    T = x.shape[0]

    def rms_norm(v, g_ref):
        # Gemma2RMSNorm: rms_norm(x, weight + 1, eps); (g+1) computed once.
        gamma = g_ref[...] + 1.0                     # [1, H]
        var = jnp.mean(v * v, axis=-1, keepdims=True)
        return v * jax.lax.rsqrt(var + RMS_EPS) * gamma

    def rotate_half_flat(t, n_heads):
        # positive half-swap per head on the flat slab; the rotate-half sign
        # is folded into the (pre-tiled) sin tables.
        parts = []
        for hh in range(n_heads):
            b = hh * HEAD_DIM
            parts.append(t[:, b + half:b + HEAD_DIM])
            parts.append(t[:, b:b + half])
        return jnp.concatenate(parts, axis=-1)

    # ---------------- attention block ----------------
    h = rms_norm(x, g_in_ref)                        # input_layernorm (f32)
    # fused QKV projection: bf16 operands, f32 accumulation, 128 output lanes
    qkv = jnp.dot(h.astype(bf16), wqkv_ref[...], preferred_element_type=f32)
    q = qkv[:, :Q_DIM]                               # [T, nH*D]  contiguous
    k = qkv[:, Q_DIM:Q_DIM + KV_DIM]                 # [T, nKV*D] (not replicated)
    v = qkv[:, Q_DIM + KV_DIM:]                      # [T, nKV*D]

    # RoPE once per flat lane-dense slab; Q tables carry SCALING/SOFTCAP.
    q = q * cosq_ref[...] + rotate_half_flat(q, NUM_HEADS) * sinq_ref[...]
    k = k * cosk_ref[...] + rotate_half_flat(k, NUM_KV_HEADS) * sink_ref[...]
    q = q.astype(bf16)
    k = k.astype(bf16)
    v = v.astype(bf16)

    # causal mask hoisted out of the per-head loop
    row = jax.lax.broadcasted_iota(jnp.int32, (T, T), 0)
    col = jax.lax.broadcasted_iota(jnp.int32, (T, T), 1)
    causal = col <= row

    contract_last = (((1,), (1,)), ((), ()))         # q @ k^T without transpose op
    outs = []
    for hh in range(NUM_HEADS):
        kv = hh // NUM_GROUPS                        # GQA mapping, no K/V copy
        q_h = q[:, hh * HEAD_DIM:(hh + 1) * HEAD_DIM]
        k_h = k[:, kv * HEAD_DIM:(kv + 1) * HEAD_DIM]
        v_h = v[:, kv * HEAD_DIM:(kv + 1) * HEAD_DIM]
        s = jax.lax.dot_general(q_h, k_h, contract_last,
                                preferred_element_type=f32)     # [T, T]
        # scaling already folded into q; softcapped logits are bounded by
        # +-SOFTCAP so no row-max subtraction is needed; mask after exp.
        p = jnp.exp(SOFTCAP * jnp.tanh(s))
        p = jnp.where(causal, p, 0.0)
        r = pl.reciprocal(jnp.sum(p, axis=-1, keepdims=True), approx=True)
        o = jnp.dot(p.astype(bf16), v_h, preferred_element_type=f32) * r
        outs.append(o)                               # [T, D]
    attn = jnp.concatenate(outs, axis=-1)            # [T, Q_DIM] lane-dense

    attn = jnp.dot(attn.astype(bf16), wo_ref[...],
                   preferred_element_type=f32)       # o_proj [T, H]
    attn = rms_norm(attn, g_pa_ref)                  # post_attention_layernorm
    x = x + attn                                     # residual

    # ---------------- MLP block ----------------
    h2 = rms_norm(x, g_pf_ref)                       # pre_feedforward_layernorm
    gu = jnp.dot(h2.astype(bf16), wgu_ref[...], preferred_element_type=f32)
    gate = gu[:, :INTER]
    up = gu[:, INTER:]
    # gelu_pytorch_tanh
    gelu = 0.5 * gate * (1.0 + jnp.tanh(GELU_C * (gate + 0.044715 * gate * gate * gate)))
    mlp = jnp.dot((gelu * up).astype(bf16), wd_ref[...], preferred_element_type=f32)
    mlp = rms_norm(mlp, g_pff_ref)                   # post_feedforward_layernorm
    out_ref[...] = x + mlp                           # residual


def gemma2_decoder_layer(hidden_states, params, position_ids, inv_freq):
    T, H = hidden_states.shape
    # rotary tables (wrapper glue): emb = [freqs, freqs]; the rotate-half sign
    # is folded into sin (first half negated); tables are pre-tiled to the Q /
    # K slab widths and the attention scale SCALING/SOFTCAP is folded into the
    # Q tables (so the kernel never scales scores).
    freqs = position_ids.astype(jnp.float32)[:, None] * inv_freq[None, :]   # [T, D/2]
    cos_d = jnp.cos(jnp.concatenate([freqs, freqs], axis=-1))               # [T, D]
    sin_h = jnp.sin(freqs)
    sin_d = jnp.concatenate([-sin_h, sin_h], axis=-1)                       # [T, D]
    c = SCALING / SOFTCAP
    cos_q = jnp.tile(cos_d, (1, NUM_HEADS)) * c                             # [T, Q_DIM]
    sin_q = jnp.tile(sin_d, (1, NUM_HEADS)) * c
    cos_k = jnp.tile(cos_d, (1, NUM_KV_HEADS))                              # [T, KV_DIM]
    sin_k = jnp.tile(sin_d, (1, NUM_KV_HEADS))
    # TODO(synk): at real T stream these per q-tile via BlockSpec (and bf16).

    args = (hidden_states,
            params["wqkv"], params["wo"], params["wgu"], params["wd"],
            params["g_in"], params["g_pa"], params["g_pf"], params["g_pff"],
            cos_q, sin_q, cos_k, sin_k)

    flops = 2 * T * (H * QKV_DIM                       # fused qkv proj
                     + NUM_HEADS * T * HEAD_DIM * 2    # QK^T + PV
                     + Q_DIM * H                       # o_proj
                     + H * 2 * INTER                   # gate_up
                     + INTER * H)                      # down
    transcendentals = 2 * NUM_HEADS * T * T + T * INTER + NUM_HEADS * T + 4 * T
    bytes_accessed = int(sum(a.size * a.dtype.itemsize for a in args) + T * H * 4)

    return pl.pallas_call(
        decoder_layer_kernel,
        out_shape=jax.ShapeDtypeStruct((T, H), jnp.float32),
        in_specs=[pl.BlockSpec(memory_space=pltpu.MemorySpace.VMEM)] * len(args),
        out_specs=pl.BlockSpec(memory_space=pltpu.MemorySpace.VMEM),
        compiler_params=pltpu.CompilerParams(vmem_limit_bytes=32 * 1024 * 1024),
        cost_estimate=pl.CostEstimate(flops=int(flops),
                                      transcendentals=int(transcendentals),
                                      bytes_accessed=bytes_accessed),
    )(*args)


def reference_layer(x, params, position_ids, inv_freq):
    """Pure-JAX reference mirroring the module math (exact softmax divide)."""
    f32, bf16 = jnp.float32, jnp.bfloat16
    T = x.shape[0]
    freqs = position_ids.astype(f32)[:, None] * inv_freq[None, :]
    cos = jnp.cos(jnp.concatenate([freqs, freqs], -1))
    sin = jnp.sin(jnp.concatenate([freqs, freqs], -1))

    def rms(v, g):
        return v * jax.lax.rsqrt(jnp.mean(v * v, -1, keepdims=True) + RMS_EPS) * (g + 1.0)

    def rot_half(v):
        d = v.shape[-1]
        return jnp.concatenate([-v[..., d // 2:], v[..., :d // 2]], -1)

    h = rms(x, params["g_in"])
    qkv = jnp.dot(h.astype(bf16), params["wqkv"], preferred_element_type=f32)
    q = qkv[:, :Q_DIM].reshape(T, NUM_HEADS, HEAD_DIM)
    k = qkv[:, Q_DIM:Q_DIM + KV_DIM].reshape(T, NUM_KV_HEADS, HEAD_DIM)
    v = qkv[:, Q_DIM + KV_DIM:].reshape(T, NUM_KV_HEADS, HEAD_DIM)
    q = q * cos[:, None] + rot_half(q) * sin[:, None]
    k = k * cos[:, None] + rot_half(k) * sin[:, None]
    k = jnp.repeat(k, NUM_GROUPS, axis=1)
    v = jnp.repeat(v, NUM_GROUPS, axis=1)
    s = jnp.einsum('qhd,khd->hqk', q.astype(bf16), k.astype(bf16),
                   preferred_element_type=f32)
    s = SOFTCAP * jnp.tanh(s * SCALING / SOFTCAP)
    causal = jnp.tril(jnp.ones((T, T), bool))
    s = jnp.where(causal[None], s, -jnp.inf)
    p = jax.nn.softmax(s, axis=-1)
    o = jnp.einsum('hqk,khd->qhd', p.astype(bf16), v.astype(bf16),
                   preferred_element_type=f32)
    attn = jnp.dot(o.reshape(T, Q_DIM).astype(bf16), params["wo"],
                   preferred_element_type=f32)
    attn = rms(attn, params["g_pa"])
    x = x + attn
    h2 = rms(x, params["g_pf"])
    gu = jnp.dot(h2.astype(bf16), params["wgu"], preferred_element_type=f32)
    gate, up = gu[:, :INTER], gu[:, INTER:]
    gelu = 0.5 * gate * (1.0 + jnp.tanh(GELU_C * (gate + 0.044715 * gate ** 3)))
    mlp = jnp.dot((gelu * up).astype(bf16), params["wd"], preferred_element_type=f32)
    mlp = rms(mlp, params["g_pff"])
    return x + mlp


def init_params(key):
    ks = jax.random.split(key, 11)
    s = 0.02
    wq = s * jax.random.normal(ks[0], (HIDDEN, Q_DIM), jnp.float32)
    wk = s * jax.random.normal(ks[1], (HIDDEN, KV_DIM), jnp.float32)
    wv = s * jax.random.normal(ks[2], (HIDDEN, KV_DIM), jnp.float32)
    p = {
        # fused QKV weight, stored bf16 [in, out]
        "wqkv": jnp.concatenate([wq, wk, wv], axis=1).astype(jnp.bfloat16),
        "wo":  (s * jax.random.normal(ks[3], (Q_DIM, HIDDEN), jnp.float32)).astype(jnp.bfloat16),
        "wgu": (s * jax.random.normal(ks[4], (HIDDEN, 2 * INTER), jnp.float32)).astype(jnp.bfloat16),
        "wd":  (s * jax.random.normal(ks[5], (INTER, HIDDEN), jnp.float32)).astype(jnp.bfloat16),
        # RMSNorm raw weights (module stores zeros-init; kernel adds +1), f32
        "g_in":  s * jax.random.normal(ks[6], (1, HIDDEN), jnp.float32),
        "g_pa":  s * jax.random.normal(ks[7], (1, HIDDEN), jnp.float32),
        "g_pf":  s * jax.random.normal(ks[8], (1, HIDDEN), jnp.float32),
        "g_pff": s * jax.random.normal(ks[9], (1, HIDDEN), jnp.float32),
    }
    return p, ks[10]


if __name__ == "__main__":
    key = jax.random.PRNGKey(0)
    params, key = init_params(key)
    hidden_states = jax.random.normal(key, (SEQ_LEN, HIDDEN), jnp.float32)

    # seq_info equivalent: one sequence spanning the whole batch (causal)
    position_ids = jnp.arange(SEQ_LEN, dtype=jnp.int32)
    inv_freq = 1.0 / (ROPE_THETA ** (jnp.arange(0, HEAD_DIM, 2, dtype=jnp.float32) / HEAD_DIM))

    out = gemma2_decoder_layer(hidden_states, params, position_ids, inv_freq)
    out = jax.block_until_ready(out)
    ref = reference_layer(hidden_states, params, position_ids, inv_freq)

    assert out.shape == (SEQ_LEN, HIDDEN)
    assert jnp.isfinite(out).all()
    assert jnp.allclose(out, ref, rtol=2e-2, atol=2e-2), float(jnp.max(jnp.abs(out - ref)))
    print("KERNEL_OK")
</pallas_src>

<mosaic_0001>
module attributes {stable_mosaic.version = 11 : i64} {
  func.func @decoder_layer_kernel(%arg0: memref<8x32xf32, #tpu.memory_space<vmem>>, %arg1: memref<32x128xbf16, #tpu.memory_space<vmem>>, %arg2: memref<64x32xbf16, #tpu.memory_space<vmem>>, %arg3: memref<32x128xbf16, #tpu.memory_space<vmem>>, %arg4: memref<64x32xbf16, #tpu.memory_space<vmem>>, %arg5: memref<1x32xf32, #tpu.memory_space<vmem>>, %arg6: memref<1x32xf32, #tpu.memory_space<vmem>>, %arg7: memref<1x32xf32, #tpu.memory_space<vmem>>, %arg8: memref<1x32xf32, #tpu.memory_space<vmem>>, %arg9: memref<8x64xf32, #tpu.memory_space<vmem>>, %arg10: memref<8x64xf32, #tpu.memory_space<vmem>>, %arg11: memref<8x32xf32, #tpu.memory_space<vmem>>, %arg12: memref<8x32xf32, #tpu.memory_space<vmem>>, %arg13: memref<8x32xf32, #tpu.memory_space<vmem>>) attributes {dimension_semantics = [], scalar_prefetch = 0 : i64, scratch_operands = 0 : i64, tpu.core_type = #tpu.core_type<tc>} {
    %c0 = arith.constant 0 : index
    %c0_0 = arith.constant 0 : index
    %0 = vector.load %arg0[%c0, %c0_0] : memref<8x32xf32, #tpu.memory_space<vmem>>, vector<8x32xf32>
    %c0_1 = arith.constant 0 : index
    %c0_2 = arith.constant 0 : index
    %1 = vector.load %arg5[%c0_1, %c0_2] : memref<1x32xf32, #tpu.memory_space<vmem>>, vector<1x32xf32>
    %cst = arith.constant 1.000000e+00 : f32
    %2 = vector.broadcast %cst : f32 to vector<1x32xf32>
    %3 = arith.addf %1, %2 : vector<1x32xf32>
    %4 = arith.mulf %0, %0 : vector<8x32xf32>
    %cst_3 = arith.constant dense<0.000000e+00> : vector<8xf32>
    %5 = vector.multi_reduction <add>, %4, %cst_3 [1] : vector<8x32xf32> to vector<8xf32>
    %6 = vector.shape_cast %5 : vector<8xf32> to vector<8x1xf32>
    %cst_4 = arith.constant 3.200000e+01 : f32
    %7 = vector.broadcast %cst_4 : f32 to vector<8x1xf32>
    %8 = arith.divf %6, %7 : vector<8x1xf32>
    %cst_5 = arith.constant 9.99999997E-7 : f32
    %9 = vector.broadcast %cst_5 : f32 to vector<8x1xf32>
    %10 = arith.addf %8, %9 : vector<8x1xf32>
    %11 = math.rsqrt %10 : vector<8x1xf32>
    %12 = vector.broadcast %11 : vector<8x1xf32> to vector<8x32xf32>
    %13 = arith.mulf %0, %12 : vector<8x32xf32>
    %14 = vector.broadcast %3 : vector<1x32xf32> to vector<8x32xf32>
    %15 = arith.mulf %13, %14 : vector<8x32xf32>
    %16 = arith.truncf %15 : vector<8x32xf32> to vector<8x32xbf16>
    %c0_6 = arith.constant 0 : index
    %c0_7 = arith.constant 0 : index
    %17 = vector.load %arg1[%c0_6, %c0_7] : memref<32x128xbf16, #tpu.memory_space<vmem>>, vector<32x128xbf16>
    %cst_8 = arith.constant dense<0.000000e+00> : vector<8x128xf32>
    %18 = tpu.matmul %16, %17, %cst_8 {dimension_numbers = #tpu.dot_dimension_numbers<[1], [0], [0], [1], [0, 0, 1, 1], [], []>} : vector<8x32xbf16>, vector<32x128xbf16>, vector<8x128xf32> -> vector<8x128xf32>
    %19 = vector.extract_strided_slice %18 {offsets = [0, 0], sizes = [8, 64], strides = [1, 1]} : vector<8x128xf32> to vector<8x64xf32>
    %20 = vector.extract_strided_slice %18 {offsets = [0, 64], sizes = [8, 32], strides = [1, 1]} : vector<8x128xf32> to vector<8x32xf32>
    %21 = vector.extract_strided_slice %18 {offsets = [0, 96], sizes = [8, 32], strides = [1, 1]} : vector<8x128xf32> to vector<8x32xf32>
    %c0_9 = arith.constant 0 : index
    %c0_10 = arith.constant 0 : index
    %22 = vector.load %arg9[%c0_9, %c0_10] : memref<8x64xf32, #tpu.memory_space<vmem>>, vector<8x64xf32>
    %23 = arith.mulf %19, %22 : vector<8x64xf32>
    %24 = vector.extract_strided_slice %19 {offsets = [0, 8], sizes = [8, 8], strides = [1, 1]} : vector<8x64xf32> to vector<8x8xf32>
    %25 = vector.extract_strided_slice %19 {offsets = [0, 0], sizes = [8, 8], strides = [1, 1]} : vector<8x64xf32> to vector<8x8xf32>
    %26 = vector.extract_strided_slice %19 {offsets = [0, 24], sizes = [8, 8], strides = [1, 1]} : vector<8x64xf32> to vector<8x8xf32>
    %27 = vector.extract_strided_slice %19 {offsets = [0, 16], sizes = [8, 8], strides = [1, 1]} : vector<8x64xf32> to vector<8x8xf32>
    %28 = vector.extract_strided_slice %19 {offsets = [0, 40], sizes = [8, 8], strides = [1, 1]} : vector<8x64xf32> to vector<8x8xf32>
    %29 = vector.extract_strided_slice %19 {offsets = [0, 32], sizes = [8, 8], strides = [1, 1]} : vector<8x64xf32> to vector<8x8xf32>
    %30 = vector.extract_strided_slice %19 {offsets = [0, 56], sizes = [8, 8], strides = [1, 1]} : vector<8x64xf32> to vector<8x8xf32>
    %31 = vector.extract_strided_slice %19 {offsets = [0, 48], sizes = [8, 8], strides = [1, 1]} : vector<8x64xf32> to vector<8x8xf32>
    %32 = tpu.concatenate %24, %25, %26, %27, %28, %29, %30, %31 in 1 : vector<8x8xf32>, vector<8x8xf32>, vector<8x8xf32>, vector<8x8xf32>, vector<8x8xf32>, vector<8x8xf32>, vector<8x8xf32>, vector<8x8xf32> -> vector<8x64xf32>
    %c0_11 = arith.constant 0 : index
    %c0_12 = arith.constant 0 : index
    %33 = vector.load %arg10[%c0_11, %c0_12] : memref<8x64xf32, #tpu.memory_space<vmem>>, vector<8x64xf32>
    %34 = arith.mulf %32, %33 : vector<8x64xf32>
    %35 = arith.addf %23, %34 : vector<8x64xf32>
    %c0_13 = arith.constant 0 : index
    %c0_14 = arith.constant 0 : index
    %36 = vector.load %arg11[%c0_13, %c0_14] : memref<8x32xf32, #tpu.memory_space<vmem>>, vector<8x32xf32>
    %37 = arith.mulf %20, %36 : vector<8x32xf32>
    %38 = vector.extract_strided_slice %20 {offsets = [0, 8], sizes = [8, 8], strides = [1, 1]} : vector<8x32xf32> to vector<8x8xf32>
    %39 = vector.extract_strided_slice %20 {offsets = [0, 0], sizes = [8, 8], strides = [1, 1]} : vector<8x32xf32> to vector<8x8xf32>
    %40 = vector.extract_strided_slice %20 {offsets = [0, 24], sizes = [8, 8], strides = [1, 1]} : vector<8x32xf32> to vector<8x8xf32>
    %41 = vector.extract_strided_slice %20 {offsets = [0, 16], sizes = [8, 8], strides = [1, 1]} : vector<8x32xf32> to vector<8x8xf32>
    %42 = tpu.concatenate %38, %39, %40, %41 in 1 : vector<8x8xf32>, vector<8x8xf32>, vector<8x8xf32>, vector<8x8xf32> -> vector<8x32xf32>
    %c0_15 = arith.constant 0 : index
    %c0_16 = arith.constant 0 : index
    %43 = vector.load %arg12[%c0_15, %c0_16] : memref<8x32xf32, #tpu.memory_space<vmem>>, vector<8x32xf32>
    %44 = arith.mulf %42, %43 : vector<8x32xf32>
    %45 = arith.addf %37, %44 : vector<8x32xf32>
    %46 = arith.truncf %35 : vector<8x64xf32> to vector<8x64xbf16>
    %47 = arith.truncf %45 : vector<8x32xf32> to vector<8x32xbf16>
    %48 = arith.truncf %21 : vector<8x32xf32> to vector<8x32xbf16>
    %49 = tpu.iota {dimensions = array<i32: 0>} : vector<8x8xi32>
    %50 = tpu.iota {dimensions = array<i32: 1>} : vector<8x8xi32>
    %51 = arith.cmpi sle, %50, %49 : vector<8x8xi32>
    %52 = vector.extract_strided_slice %46 {offsets = [0, 0], sizes = [8, 16], strides = [1, 1]} : vector<8x64xbf16> to vector<8x16xbf16>
    %53 = vector.extract_strided_slice %47 {offsets = [0, 0], sizes = [8, 16], strides = [1, 1]} : vector<8x32xbf16> to vector<8x16xbf16>
    %54 = vector.extract_strided_slice %48 {offsets = [0, 0], sizes = [8, 16], strides = [1, 1]} : vector<8x32xbf16> to vector<8x16xbf16>
    %cst_17 = arith.constant dense<0.000000e+00> : vector<8x8xf32>
    %55 = tpu.matmul %52, %53, %cst_17 {dimension_numbers = #tpu.dot_dimension_numbers<[1], [1], [0], [0], [0, 0, 1, 0], [], []>} : vector<8x16xbf16>, vector<8x16xbf16>, vector<8x8xf32> -> vector<8x8xf32>
    %56 = math.tanh %55 : vector<8x8xf32>
    %cst_18 = arith.constant 5.000000e+01 : f32
    %57 = vector.broadcast %cst_18 : f32 to vector<8x8xf32>
    %58 = arith.mulf %57, %56 : vector<8x8xf32>
    %59 = math.exp %58 : vector<8x8xf32>
    %cst_19 = arith.constant 0.000000e+00 : f32
    %60 = vector.broadcast %cst_19 : f32 to vector<8x8xf32>
    %61 = arith.select %51, %59, %60 : vector<8x8xi1>, vector<8x8xf32>
    %cst_20 = arith.constant dense<0.000000e+00> : vector<8xf32>
    %62 = vector.multi_reduction <add>, %61, %cst_20 [1] : vector<8x8xf32> to vector<8xf32>
    %63 = vector.shape_cast %62 : vector<8xf32> to vector<8x1xf32>
    %64 = tpu.reciprocal %63 {approx = true} : vector<8x1xf32> -> vector<8x1xf32>
    %65 = arith.truncf %61 : vector<8x8xf32> to vector<8x8xbf16>
    %cst_21 = arith.constant dense<0.000000e+00> : vector<8x16xf32>
    %66 = tpu.matmul %65, %54, %cst_21 {dimension_numbers = #tpu.dot_dimension_numbers<[1], [0], [0], [1], [0, 0, 1, 1], [], []>} : vector<8x8xbf16>, vector<8x16xbf16>, vector<8x16xf32> -> vector<8x16xf32>
    %67 = vector.broadcast %64 : vector<8x1xf32> to vector<8x16xf32>
    %68 = arith.mulf %66, %67 : vector<8x16xf32>
    %69 = vector.extract_strided_slice %46 {offsets = [0, 16], sizes = [8, 16], strides = [1, 1]} : vector<8x64xbf16> to vector<8x16xbf16>
    %70 = vector.extract_strided_slice %47 {offsets = [0, 0], sizes = [8, 16], strides = [1, 1]} : vector<8x32xbf16> to vector<8x16xbf16>
    %71 = vector.extract_strided_slice %48 {offsets = [0, 0], sizes = [8, 16], strides = [1, 1]} : vector<8x32xbf16> to vector<8x16xbf16>
    %cst_22 = arith.constant dense<0.000000e+00> : vector<8x8xf32>
    %72 = tpu.matmul %69, %70, %cst_22 {dimension_numbers = #tpu.dot_dimension_numbers<[1], [1], [0], [0], [0, 0, 1, 0], [], []>} : vector<8x16xbf16>, vector<8x16xbf16>, vector<8x8xf32> -> vector<8x8xf32>
    %73 = math.tanh %72 : vector<8x8xf32>
    %cst_23 = arith.constant 5.000000e+01 : f32
    %74 = vector.broadcast %cst_23 : f32 to vector<8x8xf32>
    %75 = arith.mulf %74, %73 : vector<8x8xf32>
    %76 = math.exp %75 : vector<8x8xf32>
    %cst_24 = arith.constant 0.000000e+00 : f32
    %77 = vector.broadcast %cst_24 : f32 to vector<8x8xf32>
    %78 = arith.select %51, %76, %77 : vector<8x8xi1>, vector<8x8xf32>
    %cst_25 = arith.constant dense<0.000000e+00> : vector<8xf32>
    %79 = vector.multi_reduction <add>, %78, %cst_25 [1] : vector<8x8xf32> to vector<8xf32>
    %80 = vector.shape_cast %79 : vector<8xf32> to vector<8x1xf32>
    %81 = tpu.reciprocal %80 {approx = true} : vector<8x1xf32> -> vector<8x1xf32>
    %82 = arith.truncf %78 : vector<8x8xf32> to vector<8x8xbf16>
    %cst_26 = arith.constant dense<0.000000e+00> : vector<8x16xf32>
    %83 = tpu.matmul %82, %71, %cst_26 {dimension_numbers = #tpu.dot_dimension_numbers<[1], [0], [0], [1], [0, 0, 1, 1], [], []>} : vector<8x8xbf16>, vector<8x16xbf16>, vector<8x16xf32> -> vector<8x16xf32>
    %84 = vector.broadcast %81 : vector<8x1xf32> to vector<8x16xf32>
    %85 = arith.mulf %83, %84 : vector<8x16xf32>
    %86 = vector.extract_strided_slice %46 {offsets = [0, 32], sizes = [8, 16], strides = [1, 1]} : vector<8x64xbf16> to vector<8x16xbf16>
    %87 = vector.extract_strided_slice %47 {offsets = [0, 16], sizes = [8, 16], strides = [1, 1]} : vector<8x32xbf16> to vector<8x16xbf16>
    %88 = vector.extract_strided_slice %48 {offsets = [0, 16], sizes = [8, 16], strides = [1, 1]} : vector<8x32xbf16> to vector<8x16xbf16>
    %cst_27 = arith.constant dense<0.000000e+00> : vector<8x8xf32>
    %89 = tpu.matmul %86, %87, %cst_27 {dimension_numbers = #tpu.dot_dimension_numbers<[1], [1], [0], [0], [0, 0, 1, 0], [], []>} : vector<8x16xbf16>, vector<8x16xbf16>, vector<8x8xf32> -> vector<8x8xf32>
    %90 = math.tanh %89 : vector<8x8xf32>
    %cst_28 = arith.constant 5.000000e+01 : f32
    %91 = vector.broadcast %cst_28 : f32 to vector<8x8xf32>
    %92 = arith.mulf %91, %90 : vector<8x8xf32>
    %93 = math.exp %92 : vector<8x8xf32>
    %cst_29 = arith.constant 0.000000e+00 : f32
    %94 = vector.broadcast %cst_29 : f32 to vector<8x8xf32>
    %95 = arith.select %51, %93, %94 : vector<8x8xi1>, vector<8x8xf32>
    %cst_30 = arith.constant dense<0.000000e+00> : vector<8xf32>
    %96 = vector.multi_reduction <add>, %95, %cst_30 [1] : vector<8x8xf32> to vector<8xf32>
    %97 = vector.shape_cast %96 : vector<8xf32> to vector<8x1xf32>
    %98 = tpu.reciprocal %97 {approx = true} : vector<8x1xf32> -> vector<8x1xf32>
    %99 = arith.truncf %95 : vector<8x8xf32> to vector<8x8xbf16>
    %cst_31 = arith.constant dense<0.000000e+00> : vector<8x16xf32>
    %100 = tpu.matmul %99, %88, %cst_31 {dimension_numbers = #tpu.dot_dimension_numbers<[1], [0], [0], [1], [0, 0, 1, 1], [], []>} : vector<8x8xbf16>, vector<8x16xbf16>, vector<8x16xf32> -> vector<8x16xf32>
    %101 = vector.broadcast %98 : vector<8x1xf32> to vector<8x16xf32>
    %102 = arith.mulf %100, %101 : vector<8x16xf32>
    %103 = vector.extract_strided_slice %46 {offsets = [0, 48], sizes = [8, 16], strides = [1, 1]} : vector<8x64xbf16> to vector<8x16xbf16>
    %104 = vector.extract_strided_slice %47 {offsets = [0, 16], sizes = [8, 16], strides = [1, 1]} : vector<8x32xbf16> to vector<8x16xbf16>
    %105 = vector.extract_strided_slice %48 {offsets = [0, 16], sizes = [8, 16], strides = [1, 1]} : vector<8x32xbf16> to vector<8x16xbf16>
    %cst_32 = arith.constant dense<0.000000e+00> : vector<8x8xf32>
    %106 = tpu.matmul %103, %104, %cst_32 {dimension_numbers = #tpu.dot_dimension_numbers<[1], [1], [0], [0], [0, 0, 1, 0], [], []>} : vector<8x16xbf16>, vector<8x16xbf16>, vector<8x8xf32> -> vector<8x8xf32>
    %107 = math.tanh %106 : vector<8x8xf32>
    %cst_33 = arith.constant 5.000000e+01 : f32
    %108 = vector.broadcast %cst_33 : f32 to vector<8x8xf32>
    %109 = arith.mulf %108, %107 : vector<8x8xf32>
    %110 = math.exp %109 : vector<8x8xf32>
    %cst_34 = arith.constant 0.000000e+00 : f32
    %111 = vector.broadcast %cst_34 : f32 to vector<8x8xf32>
    %112 = arith.select %51, %110, %111 : vector<8x8xi1>, vector<8x8xf32>
    %cst_35 = arith.constant dense<0.000000e+00> : vector<8xf32>
    %113 = vector.multi_reduction <add>, %112, %cst_35 [1] : vector<8x8xf32> to vector<8xf32>
    %114 = vector.shape_cast %113 : vector<8xf32> to vector<8x1xf32>
    %115 = tpu.reciprocal %114 {approx = true} : vector<8x1xf32> -> vector<8x1xf32>
    %116 = arith.truncf %112 : vector<8x8xf32> to vector<8x8xbf16>
    %cst_36 = arith.constant dense<0.000000e+00> : vector<8x16xf32>
    %117 = tpu.matmul %116, %105, %cst_36 {dimension_numbers = #tpu.dot_dimension_numbers<[1], [0], [0], [1], [0, 0, 1, 1], [], []>} : vector<8x8xbf16>, vector<8x16xbf16>, vector<8x16xf32> -> vector<8x16xf32>
    %118 = vector.broadcast %115 : vector<8x1xf32> to vector<8x16xf32>
    %119 = arith.mulf %117, %118 : vector<8x16xf32>
    %120 = tpu.concatenate %68, %85, %102, %119 in 1 : vector<8x16xf32>, vector<8x16xf32>, vector<8x16xf32>, vector<8x16xf32> -> vector<8x64xf32>
    %121 = arith.truncf %120 : vector<8x64xf32> to vector<8x64xbf16>
    %c0_37 = arith.constant 0 : index
    %c0_38 = arith.constant 0 : index
    %122 = vector.load %arg2[%c0_37, %c0_38] : memref<64x32xbf16, #tpu.memory_space<vmem>>, vector<64x32xbf16>
    %cst_39 = arith.constant dense<0.000000e+00> : vector<8x32xf32>
    %123 = tpu.matmul %121, %122, %cst_39 {dimension_numbers = #tpu.dot_dimension_numbers<[1], [0], [0], [1], [0, 0, 1, 1], [], []>} : vector<8x64xbf16>, vector<64x32xbf16>, vector<8x32xf32> -> vector<8x32xf32>
    %c0_40 = arith.constant 0 : index
    %c0_41 = arith.constant 0 : index
    %124 = vector.load %arg6[%c0_40, %c0_41] : memref<1x32xf32, #tpu.memory_space<vmem>>, vector<1x32xf32>
    %cst_42 = arith.constant 1.000000e+00 : f32
    %125 = vector.broadcast %cst_42 : f32 to vector<1x32xf32>
    %126 = arith.addf %124, %125 : vector<1x32xf32>
    %127 = arith.mulf %123, %123 : vector<8x32xf32>
    %cst_43 = arith.constant dense<0.000000e+00> : vector<8xf32>
    %128 = vector.multi_reduction <add>, %127, %cst_43 [1] : vector<8x32xf32> to vector<8xf32>
    %129 = vector.shape_cast %128 : vector<8xf32> to vector<8x1xf32>
    %cst_44 = arith.constant 3.200000e+01 : f32
    %130 = vector.broadcast %cst_44 : f32 to vector<8x1xf32>
    %131 = arith.divf %129, %130 : vector<8x1xf32>
    %cst_45 = arith.constant 9.99999997E-7 : f32
    %132 = vector.broadcast %cst_45 : f32 to vector<8x1xf32>
    %133 = arith.addf %131, %132 : vector<8x1xf32>
    %134 = math.rsqrt %133 : vector<8x1xf32>
    %135 = vector.broadcast %134 : vector<8x1xf32> to vector<8x32xf32>
    %136 = arith.mulf %123, %135 : vector<8x32xf32>
    %137 = vector.broadcast %126 : vector<1x32xf32> to vector<8x32xf32>
    %138 = arith.mulf %136, %137 : vector<8x32xf32>
    %139 = arith.addf %0, %138 : vector<8x32xf32>
    %c0_46 = arith.constant 0 : index
    %c0_47 = arith.constant 0 : index
    %140 = vector.load %arg7[%c0_46, %c0_47] : memref<1x32xf32, #tpu.memory_space<vmem>>, vector<1x32xf32>
    %cst_48 = arith.constant 1.000000e+00 : f32
    %141 = vector.broadcast %cst_48 : f32 to vector<1x32xf32>
    %142 = arith.addf %140, %141 : vector<1x32xf32>
    %143 = arith.mulf %139, %139 : vector<8x32xf32>
    %cst_49 = arith.constant dense<0.000000e+00> : vector<8xf32>
    %144 = vector.multi_reduction <add>, %143, %cst_49 [1] : vector<8x32xf32> to vector<8xf32>
    %145 = vector.shape_cast %144 : vector<8xf32> to vector<8x1xf32>
    %cst_50 = arith.constant 3.200000e+01 : f32
    %146 = vector.broadcast %cst_50 : f32 to vector<8x1xf32>
    %147 = arith.divf %145, %146 : vector<8x1xf32>
    %cst_51 = arith.constant 9.99999997E-7 : f32
    %148 = vector.broadcast %cst_51 : f32 to vector<8x1xf32>
    %149 = arith.addf %147, %148 : vector<8x1xf32>
    %150 = math.rsqrt %149 : vector<8x1xf32>
    %151 = vector.broadcast %150 : vector<8x1xf32> to vector<8x32xf32>
    %152 = arith.mulf %139, %151 : vector<8x32xf32>
    %153 = vector.broadcast %142 : vector<1x32xf32> to vector<8x32xf32>
    %154 = arith.mulf %152, %153 : vector<8x32xf32>
    %155 = arith.truncf %154 : vector<8x32xf32> to vector<8x32xbf16>
    %c0_52 = arith.constant 0 : index
    %c0_53 = arith.constant 0 : index
    %156 = vector.load %arg3[%c0_52, %c0_53] : memref<32x128xbf16, #tpu.memory_space<vmem>>, vector<32x128xbf16>
    %cst_54 = arith.constant dense<0.000000e+00> : vector<8x128xf32>
    %157 = tpu.matmul %155, %156, %cst_54 {dimension_numbers = #tpu.dot_dimension_numbers<[1], [0], [0], [1], [0, 0, 1, 1], [], []>} : vector<8x32xbf16>, vector<32x128xbf16>, vector<8x128xf32> -> vector<8x128xf32>
    %158 = vector.extract_strided_slice %157 {offsets = [0, 0], sizes = [8, 64], strides = [1, 1]} : vector<8x128xf32> to vector<8x64xf32>
    %159 = vector.extract_strided_slice %157 {offsets = [0, 64], sizes = [8, 64], strides = [1, 1]} : vector<8x128xf32> to vector<8x64xf32>
    %cst_55 = arith.constant 5.000000e-01 : f32
    %160 = vector.broadcast %cst_55 : f32 to vector<8x64xf32>
    %161 = arith.mulf %160, %158 : vector<8x64xf32>
    %cst_56 = arith.constant 4.471500e-02 : f32
    %162 = vector.broadcast %cst_56 : f32 to vector<8x64xf32>
    %163 = arith.mulf %162, %158 : vector<8x64xf32>
    %164 = arith.mulf %163, %158 : vector<8x64xf32>
    %165 = arith.mulf %164, %158 : vector<8x64xf32>
    %166 = arith.addf %158, %165 : vector<8x64xf32>
    %cst_57 = arith.constant 0.797884583 : f32
    %167 = vector.broadcast %cst_57 : f32 to vector<8x64xf32>
    %168 = arith.mulf %167, %166 : vector<8x64xf32>
    %169 = math.tanh %168 : vector<8x64xf32>
    %cst_58 = arith.constant 1.000000e+00 : f32
    %170 = vector.broadcast %cst_58 : f32 to vector<8x64xf32>
    %171 = arith.addf %170, %169 : vector<8x64xf32>
    %172 = arith.mulf %161, %171 : vector<8x64xf32>
    %173 = arith.mulf %172, %159 : vector<8x64xf32>
    %174 = arith.truncf %173 : vector<8x64xf32> to vector<8x64xbf16>
    %c0_59 = arith.constant 0 : index
    %c0_60 = arith.constant 0 : index
    %175 = vector.load %arg4[%c0_59, %c0_60] : memref<64x32xbf16, #tpu.memory_space<vmem>>, vector<64x32xbf16>
    %cst_61 = arith.constant dense<0.000000e+00> : vector<8x32xf32>
    %176 = tpu.matmul %174, %175, %cst_61 {dimension_numbers = #tpu.dot_dimension_numbers<[1], [0], [0], [1], [0, 0, 1, 1], [], []>} : vector<8x64xbf16>, vector<64x32xbf16>, vector<8x32xf32> -> vector<8x32xf32>
    %c0_62 = arith.constant 0 : index
    %c0_63 = arith.constant 0 : index
    %177 = vector.load %arg8[%c0_62, %c0_63] : memref<1x32xf32, #tpu.memory_space<vmem>>, vector<1x32xf32>
    %cst_64 = arith.constant 1.000000e+00 : f32
    %178 = vector.broadcast %cst_64 : f32 to vector<1x32xf32>
    %179 = arith.addf %177, %178 : vector<1x32xf32>
    %180 = arith.mulf %176, %176 : vector<8x32xf32>
    %cst_65 = arith.constant dense<0.000000e+00> : vector<8xf32>
    %181 = vector.multi_reduction <add>, %180, %cst_65 [1] : vector<8x32xf32> to vector<8xf32>
    %182 = vector.shape_cast %181 : vector<8xf32> to vector<8x1xf32>
    %cst_66 = arith.constant 3.200000e+01 : f32
    %183 = vector.broadcast %cst_66 : f32 to vector<8x1xf32>
    %184 = arith.divf %182, %183 : vector<8x1xf32>
    %cst_67 = arith.constant 9.99999997E-7 : f32
    %185 = vector.broadcast %cst_67 : f32 to vector<8x1xf32>
    %186 = arith.addf %184, %185 : vector<8x1xf32>
    %187 = math.rsqrt %186 : vector<8x1xf32>
    %188 = vector.broadcast %187 : vector<8x1xf32> to vector<8x32xf32>
    %189 = arith.mulf %176, %188 : vector<8x32xf32>
    %190 = vector.broadcast %179 : vector<1x32xf32> to vector<8x32xf32>
    %191 = arith.mulf %189, %190 : vector<8x32xf32>
    %192 = arith.addf %139, %191 : vector<8x32xf32>
    %c0_68 = arith.constant 0 : index
    %c0_69 = arith.constant 0 : index
    %193 = vector.load %arg13[%c0_68, %c0_69] : memref<8x32xf32, #tpu.memory_space<vmem>>, vector<8x32xf32>
    tpu.vector_store %arg13[%c0_68, %c0_69], %192 {strides = array<i32>} : memref<8x32xf32, #tpu.memory_space<vmem>>, vector<8x32xf32>,
    return
  }
}

</mosaic_0001>

<llo_original>
// kernel: tpu_custom_call.1
$region0: #{tpu_custom_call.1}
  #allocation0 [shape = 'u32[]', space=smem, size = 0x4, offset = 0x4, fixed_abs, tag = 'smem constant byte address 0x4 - core index']
  #allocation1 [shape = 'u32[144,128]{1,0:T(1,128)}', space=vmem, size = 0x12000, scoped, tag = 'internal scratch']
  %s0 = inlined_call_operand.vmem [shape: f32[8,32], index: 0, kind: input, shape index: {}]
  %s1 = inlined_call_operand.vmem [shape: bf16[32,128], index: 1, kind: input, shape index: {}]
  %s2 = inlined_call_operand.vmem [shape: bf16[64,32], index: 2, kind: input, shape index: {}]
  %s3 = inlined_call_operand.vmem [shape: bf16[32,128], index: 3, kind: input, shape index: {}]
  %s4 = inlined_call_operand.vmem [shape: bf16[64,32], index: 4, kind: input, shape index: {}]
  %s5 = inlined_call_operand.vmem [shape: f32[1,32], index: 5, kind: input, shape index: {}]
  %s6 = inlined_call_operand.vmem [shape: f32[1,32], index: 6, kind: input, shape index: {}]
  %s7 = inlined_call_operand.vmem [shape: f32[1,32], index: 7, kind: input, shape index: {}]
  %s8 = inlined_call_operand.vmem [shape: f32[1,32], index: 8, kind: input, shape index: {}]
  %s9 = inlined_call_operand.vmem [shape: f32[8,64], index: 9, kind: input, shape index: {}]
  %s10 = inlined_call_operand.vmem [shape: f32[8,64], index: 10, kind: input, shape index: {}]
  %s11 = inlined_call_operand.vmem [shape: f32[8,32], index: 11, kind: input, shape index: {}]
  %s12 = inlined_call_operand.vmem [shape: f32[8,32], index: 12, kind: input, shape index: {}]
  %s13 = inlined_call_operand.hbm [shape: f32[8,32], index: 13, kind: output, shape index: {}]
  %s14 = sld [smem:[#allocation0]]
  $region62: #{tpu_custom_call.1} parent=0
    _
  %s16 = ssub.s32 1, %s14
  %s17 = scalar_select 0, %s16, %s14
  $region1: #{tpu_custom_call.1} parent=0
    #allocation2 [shape = 'u8[4096]{0}', space=vmem, size = 0x1000, scoped, tag = 'output window, operand 0, single buffered']
    #allocation3 [shape = 's32[1]{0}', space=sflag, size = 0x4, scoped, tag = 'scoped memory for tpu_custom_call.1']
    %18 = vsyncpa [#allocation3], 0
    // Predicated region
    $region2: #{tpu_custom_call.1} parent=1 // pred_check
      _
    $region3: #{tpu_custom_call.1} parent=1 // pred_check_branch
      %20 = sbr.rel (0) target = $region5
    $region4: #{tpu_custom_call.1} parent=1 // pred_region
      _
    $region5: #{tpu_custom_call.1} parent=1 // pred_fallthru
      _
    // Predicated region
    $region6: #{tpu_custom_call.1} parent=1 // pred_check
      _
    $region7: #{tpu_custom_call.1} parent=1 // pred_check_branch
      %22 = sbr.rel (0) target = $region9
    $region8: #{tpu_custom_call.1} parent=1 // pred_region
      _
    $region9: #{tpu_custom_call.1} parent=1 // pred_fallthru
      _
    // Predicated region
    $region10: #{tpu_custom_call.1} parent=1 // pred_check
      _
    $region11: #{tpu_custom_call.1} parent=1 // pred_check_branch
      %24 = sbr.rel (0) target = $region13
    $region12: #{tpu_custom_call.1} parent=1 // pred_region
      _
    $region13: #{tpu_custom_call.1} parent=1 // pred_fallthru
      _
    // Predicated region
    $region14: #{tpu_custom_call.1} parent=1 // pred_check
      _
    $region15: #{tpu_custom_call.1} parent=1 // pred_check_branch
      %26 = sbr.rel (0) target = $region17
    $region16: #{tpu_custom_call.1} parent=1 // pred_region
      _
    $region17: #{tpu_custom_call.1} parent=1 // pred_fallthru
      _
    // Predicated region
    $region18: #{tpu_custom_call.1} parent=1 // pred_check
      _
    $region19: #{tpu_custom_call.1} parent=1 // pred_check_branch
      %28 = sbr.rel (0) target = $region21
    $region20: #{tpu_custom_call.1} parent=1 // pred_region
      _
    $region21: #{tpu_custom_call.1} parent=1 // pred_fallthru
      _
    // Predicated region
    $region22: #{tpu_custom_call.1} parent=1 // pred_check
      _
    $region23: #{tpu_custom_call.1} parent=1 // pred_check_branch
      %30 = sbr.rel (0) target = $region25
    $region24: #{tpu_custom_call.1} parent=1 // pred_region
      _
    $region25: #{tpu_custom_call.1} parent=1 // pred_fallthru
      _
    // Predicated region
    $region26: #{tpu_custom_call.1} parent=1 // pred_check
      _
    $region27: #{tpu_custom_call.1} parent=1 // pred_check_branch
      %32 = sbr.rel (0) target = $region29
    $region28: #{tpu_custom_call.1} parent=1 // pred_region
      _
    $region29: #{tpu_custom_call.1} parent=1 // pred_fallthru
      _
    // Predicated region
    $region30: #{tpu_custom_call.1} parent=1 // pred_check
      _
    $region31: #{tpu_custom_call.1} parent=1 // pred_check_branch
      %34 = sbr.rel (0) target = $region33
    $region32: #{tpu_custom_call.1} parent=1 // pred_region
      _
    $region33: #{tpu_custom_call.1} parent=1 // pred_fallthru
      _
    // Predicated region
    $region34: #{tpu_custom_call.1} parent=1 // pred_check
      _
    $region35: #{tpu_custom_call.1} parent=1 // pred_check_branch
      %36 = sbr.rel (0) target = $region37
    $region36: #{tpu_custom_call.1} parent=1 // pred_region
      _
    $region37: #{tpu_custom_call.1} parent=1 // pred_fallthru
      _
    // Predicated region
    $region38: #{tpu_custom_call.1} parent=1 // pred_check
      _
    $region39: #{tpu_custom_call.1} parent=1 // pred_check_branch
      %38 = sbr.rel (0) target = $region41
    $region40: #{tpu_custom_call.1} parent=1 // pred_region
      _
    $region41: #{tpu_custom_call.1} parent=1 // pred_fallthru
      _
    // Predicated region
    $region42: #{tpu_custom_call.1} parent=1 // pred_check
      _
    $region43: #{tpu_custom_call.1} parent=1 // pred_check_branch
      %40 = sbr.rel (0) target = $region45
    $region44: #{tpu_custom_call.1} parent=1 // pred_region
      _
    $region45: #{tpu_custom_call.1} parent=1 // pred_fallthru
      _
    // Predicated region
    $region46: #{tpu_custom_call.1} parent=1 // pred_check
      _
    $region47: #{tpu_custom_call.1} parent=1 // pred_check_branch
      %42 = sbr.rel (0) target = $region49
    $region48: #{tpu_custom_call.1} parent=1 // pred_region
      _
    $region49: #{tpu_custom_call.1} parent=1 // pred_fallthru
      _
    // Predicated region
    $region50: #{tpu_custom_call.1} parent=1 // pred_check
      _
    $region51: #{tpu_custom_call.1} parent=1 // pred_check_branch
      %44 = sbr.rel (0) target = $region53
    $region52: #{tpu_custom_call.1} parent=1 // pred_region
      _
    $region53: #{tpu_custom_call.1} parent=1 // pred_fallthru
      _
    %v46 = vld [vmem:[%s0] sm:$0xff]
    %v47 = vld [vmem:[%s5] sm:$0x1]
    %v48 = vadd.f32 %v47, 1.0
    %v49 = vmul.f32 %v46, %v46
    %vm50 = vcmask 261120
    %v51 = vsel %vm50, %v49, 0.0
    %52 = vadd.xlane.f32.xlu0 %v51
    %v53 = vpop.xlane.xlu0 %52
    %v54 = vrcp.pop 32.0
    %v55 = vmul.f32 %v53, %v54
    %v56 = vadd.f32 %v55, 1e-06
    %v57 = vrsqrt.pop %v56
    %v58 = vmul.f32 %v46, %v57
    %v60 = vlaneseq
    %v61 = vshrl.u32 %v60, 7
    %v62 = vsub.s32 0, %v61
    %v63 = vrot.slane %v48, %v62
    %v65 = vmul.f32 %v58, %v63
    %v66 = vpack.c.bf16 %v65, %v65
    %v67 = vld [vmem:[%s1] sm:$0xf]
    %v68 = vld [vmem:[%s1 + $0x4] sm:$0xf]
    %v69 = vld [vmem:[%s1 + $0x8] sm:$0xf]
    %v70 = vld [vmem:[%s1 + $0xc] sm:$0xf]
    %v75 = vunpack.c.l.b16 %v67
    %v76 = vunpack.c.l.b16 %v68
    %v77 = vunpack.c.l.b16 %v69
    %v78 = vunpack.c.l.b16 %v70
    %v79 = vpack.c.b16 %v76, %v75
    %v80 = vpack.c.b16 %v78, %v77
    %v84 = vsel %vm50, %v66, 0
    %86 = vmatprep.subr.bf16.mxu0 0
    %87 = vmatpush1.bf16.msra.mxu0 0
    %88 = vmatprep.subr.bf16.mxu0 0
    %89 = vmatpush1.bf16.msra.mxu0 0
    %90 = vmatprep.subr.bf16.mxu0 0
    %91 = vmatpush1.bf16.msra.mxu0 0
    %92 = vmatprep.subr.bf16.mxu0 0
    %93 = vmatpush1.bf16.msra.mxu0 0
    %94 = vmatprep.subr.bf16.mxu0 0
    %95 = vmatpush1.bf16.msra.mxu0 0
    %96 = vmatprep.subr.bf16.mxu0 0
    %97 = vmatpush1.bf16.msra.mxu0 0
    %98 = vmatprep.subr.bf16.mxu0 0
    %99 = vmatpush1.bf16.msra.mxu0 %v80
    %100 = vmatprep.subr.bf16.mxu0 0
    %101 = vmatpush1.bf16.msra.mxu0 %v79
    %102 = vmatprep.subr.bf16.mxu0 0
    %103 = vmatpush2.bf16.msra.mxu0 0
    %104 = vmatprep.subr.bf16.mxu0 0
    %105 = vmatpush2.bf16.msra.mxu0 0
    %106 = vmatprep.subr.bf16.mxu0 0
    %107 = vmatpush2.bf16.msra.mxu0 0
    %108 = vmatprep.subr.bf16.mxu0 0
    %109 = vmatpush2.bf16.msra.mxu0 0
    %110 = vmatprep.subr.bf16.mxu0 0
    %111 = vmatpush2.bf16.msra.mxu0 0
    %112 = vmatprep.subr.bf16.mxu0 0
    %113 = vmatpush2.bf16.msra.mxu0 0
    %114 = vmatprep.subr.bf16.mxu0 0
    %115 = vmatpush2.bf16.msra.mxu0 0
    %116 = vmatprep.subr.bf16.mxu0 0
    %117 = vmatpush2.bf16.msra.mxu0 0
    %118 = vmatprep.mubr.bf16.mxu0 0
    %119 = vmatmul.mubr.bf16.gmra.mxu0 %v84
    %v120 = vpop.f32.mrf.mxu0
    %v121 = vadd.f32 0.0, %v120
    %v122 = vpop.f32.mrf.mxu0
    %v123 = vpop.f32.mrf.mxu0
    %v124 = vpop.f32.mrf.mxu0
    %125 = vdwg.mxu0
    %v126 = vld [vmem:[%s9] sm:$0xff]
    %v127 = vmul.f32 %v121, %v126
    %129 = vrot.lane.b32.xlu0 %v121, 120
    %v130 = vpop.permute.xlu0 %129
    %132 = vrot.lane.b32.xlu0 %v121, 8
    %v133 = vpop.permute.xlu0 %132
    %vm135 = vcmask 64512
    %v136 = vsel %vm135, %v130, %v133
    %vm137 = vcmask 130048
    %v138 = vsel %vm137, %v136, %v130
    %vm139 = vcmask 195584
    %v140 = vsel %vm139, %v138, %v133
    %v141 = vsel %vm50, %v140, %v130
    %vm142 = vcmask 326656
    %v143 = vsel %vm142, %v141, %v133
    %vm144 = vcmask 392192
    %v145 = vsel %vm144, %v143, %v130
    %vm146 = vcmask 457728
    %v147 = vsel %vm146, %v145, %v133
    %v148 = vld [vmem:[%s10] sm:$0xff]
    %v149 = vmul.f32 %v147, %v148
    %v150 = vadd.f32 %v127, %v149
    %v151 = vld [vmem:[%s11] sm:$0xff]
    %153 = vrot.lane.b32.xlu0 %v151, 64
    %v154 = vpop.permute.xlu0 %153
    %v156 = vmul.f32 %v121, %v154
    %157 = vrot.lane.b32.xlu0 %v121, 56
    %v158 = vpop.permute.xlu0 %157
    %160 = vrot.lane.b32.xlu0 %v121, 72
    %v161 = vpop.permute.xlu0 %160
    %v163 = vsel %vm135, %v158, %v161
    %v164 = vsel %vm137, %v163, %v158
    %v165 = vsel %vm139, %v164, %v161
    %v166 = vld [vmem:[%s12] sm:$0xff]
    %v167 = vmul.f32 %v165, %v166
    %169 = vrot.lane.b32.xlu0 %v167, 64
    %v170 = vpop.permute.xlu0 %169
    %v172 = vadd.f32 %v156, %v170
    %v173 = vpack.c.bf16 %v150, %v150
    %v174 = vpack.c.bf16 %v172, %v172
    %v175 = vpack.c.bf16 %v121, %v121
    %v176 = vlaneseq
    %v177 = vshrl.u32 %v176, 7
    %v178 = vlaneseq
    %v179 = vand.u32 %v178, 127
    %vm180 = vcmp.le.s32.totalorder %v179, %v177
    %182 = vrot.lane.b32.xlu0 %v174, 64
    %v183 = vpop.permute.xlu0 %182
    %v185 = vsel %vm137, %v173, 0
    %v188 = vsel %vm137, %v183, 0
    %190 = vmatprep.subr.bf16.mxu0 0
    %191 = vmatpush1.bf16.xpose.msra.mxu0 0
    %192 = vmatprep.subr.bf16.mxu0 0
    %193 = vmatpush1.bf16.xpose.msra.mxu0 0
    %194 = vmatprep.subr.bf16.mxu0 0
    %195 = vmatpush1.bf16.xpose.msra.mxu0 0
    %196 = vmatprep.subr.bf16.mxu0 0
    %197 = vmatpush1.bf16.xpose.msra.mxu0 0
    %198 = vmatprep.subr.bf16.mxu0 0
    %199 = vmatpush1.bf16.xpose.msra.mxu0 0
    %200 = vmatprep.subr.bf16.mxu0 0
    %201 = vmatpush1.bf16.xpose.msra.mxu0 0
    %202 = vmatprep.subr.bf16.mxu0 0
    %203 = vmatpush1.bf16.xpose.msra.mxu0 0
    %204 = vmatprep.subr.bf16.mxu0 0
    %205 = vmatpush1.bf16.xpose.msra.mxu0 %v188
    %206 = vmatprep.subr.bf16.mxu0 0
    %207 = vmatpush2.bf16.xpose.msra.mxu0 0
    %208 = vmatprep.subr.bf16.mxu0 0
    %209 = vmatpush2.bf16.xpose.msra.mxu0 0
    %210 = vmatprep.subr.bf16.mxu0 0
    %211 = vmatpush2.bf16.xpose.msra.mxu0 0
    %212 = vmatprep.subr.bf16.mxu0 0
    %213 = vmatpush2.bf16.xpose.msra.mxu0 0
    %214 = vmatprep.subr.bf16.mxu0 0
    %215 = vmatpush2.bf16.xpose.msra.mxu0 0
    %216 = vmatprep.subr.bf16.mxu0 0
    %217 = vmatpush2.bf16.xpose.msra.mxu0 0
    %218 = vmatprep.subr.bf16.mxu0 0
    %219 = vmatpush2.bf16.xpose.msra.mxu0 0
    %220 = vmatprep.subr.bf16.mxu0 0
    %221 = vmatpush2.bf16.xpose.msra.mxu0 0
    %222 = vmatprep.mubr.bf16.mxu0 0
    %223 = vmatmul.mubr.bf16.gmra.mxu0 %v185
    %v224 = vpop.f32.mrf.mxu0
    %v225 = vadd.f32 0.0, %v224
    %v226 = vpop.f32.mrf.mxu0
    %v227 = vpop.f32.mrf.mxu0
    %v228 = vpop.f32.mrf.mxu0
    %229 = vdwg.mxu0
    %v230 = vtanh.pop %v225
    %v231 = vmul.f32 %v230, 50.0
    %v232 = vmul.f32 %v231, 1.442695
    %v233 = vpow.pop %v232
    %v234 = vsel %vm180, %v233, 0.0
    %v235 = vsel %vm135, %v234, 0.0
    %236 = vadd.xlane.f32.xlu0 %v235
    %v237 = vpop.xlane.xlu0 %236
    %v238 = vrcp.pop %v237
    %v239 = vpack.c.bf16 %v234, %v234
    %241 = vrot.lane.b32.xlu0 %v175, 32
    %v242 = vpop.permute.xlu0 %241
    %v244 = vsel %vm135, %v239, 0
    %vm246 = vcmask 1043456
    %v248 = vsel %vm246, %v242, 0
    %250 = vmatprep.subr.bf16.mxu0 0
    %251 = vmatpush1.bf16.msra.mxu0 0
    %252 = vmatprep.subr.bf16.mxu0 0
    %253 = vmatpush1.bf16.msra.mxu0 0
    %254 = vmatprep.subr.bf16.mxu0 0
    %255 = vmatpush1.bf16.msra.mxu0 0
    %256 = vmatprep.subr.bf16.mxu0 0
    %257 = vmatpush1.bf16.msra.mxu0 0
    %258 = vmatprep.subr.bf16.mxu0 0
    %259 = vmatpush1.bf16.msra.mxu0 0
    %260 = vmatprep.subr.bf16.mxu0 0
    %261 = vmatpush1.bf16.msra.mxu0 0
    %262 = vmatprep.subr.bf16.mxu0 0
    %263 = vmatpush1.bf16.msra.mxu0 0
    %264 = vmatprep.subr.bf16.mxu0 0
    %265 = vmatpush1.bf16.msra.mxu0 %v248
    %266 = vmatprep.subr.bf16.mxu0 0
    %267 = vmatpush2.bf16.msra.mxu0 0
    %268 = vmatprep.subr.bf16.mxu0 0
    %269 = vmatpush2.bf16.msra.mxu0 0
    %270 = vmatprep.subr.bf16.mxu0 0
    %271 = vmatpush2.bf16.msra.mxu0 0
    %272 = vmatprep.subr.bf16.mxu0 0
    %273 = vmatpush2.bf16.msra.mxu0 0
    %274 = vmatprep.subr.bf16.mxu0 0
    %275 = vmatpush2.bf16.msra.mxu0 0
    %276 = vmatprep.subr.bf16.mxu0 0
    %277 = vmatpush2.bf16.msra.mxu0 0
    %278 = vmatprep.subr.bf16.mxu0 0
    %279 = vmatpush2.bf16.msra.mxu0 0
    %280 = vmatprep.subr.bf16.mxu0 0
    %281 = vmatpush2.bf16.msra.mxu0 0
    %282 = vmatprep.mubr.bf16.mxu0 0
    %283 = vmatmul.mubr.bf16.gmra.mxu0 %v244
    %v284 = vpop.f32.mrf.mxu0
    %v285 = vadd.f32 0.0, %v284
    %v286 = vpop.f32.mrf.mxu0
    %v287 = vpop.f32.mrf.mxu0
    %v288 = vpop.f32.mrf.mxu0
    %289 = vdwg.mxu0
    %v290 = vmul.f32 %v285, %v238
    %292 = vrot.lane.b32.xlu0 %v173, 112
    %v293 = vpop.permute.xlu0 %292
    %v295 = vsel %vm137, %v293, 0
    %297 = vmatprep.subr.bf16.mxu0 0
    %298 = vmatpush1.bf16.xpose.msra.mxu0 0
    %299 = vmatprep.subr.bf16.mxu0 0
    %300 = vmatpush1.bf16.xpose.msra.mxu0 0
    %301 = vmatprep.subr.bf16.mxu0 0
    %302 = vmatpush1.bf16.xpose.msra.mxu0 0
    %303 = vmatprep.subr.bf16.mxu0 0
    %304 = vmatpush1.bf16.xpose.msra.mxu0 0
    %305 = vmatprep.subr.bf16.mxu0 0
    %306 = vmatpush1.bf16.xpose.msra.mxu0 0
    %307 = vmatprep.subr.bf16.mxu0 0
    %308 = vmatpush1.bf16.xpose.msra.mxu0 0
    %309 = vmatprep.subr.bf16.mxu0 0
    %310 = vmatpush1.bf16.xpose.msra.mxu0 0
    %311 = vmatprep.subr.bf16.mxu0 0
    %312 = vmatpush1.bf16.xpose.msra.mxu0 %v188
    %313 = vmatprep.subr.bf16.mxu0 0
    %314 = vmatpush2.bf16.xpose.msra.mxu0 0
    %315 = vmatprep.subr.bf16.mxu0 0
    %316 = vmatpush2.bf16.xpose.msra.mxu0 0
    %317 = vmatprep.subr.bf16.mxu0 0
    %318 = vmatpush2.bf16.xpose.msra.mxu0 0
    %319 = vmatprep.subr.bf16.mxu0 0
    %320 = vmatpush2.bf16.xpose.msra.mxu0 0
    %321 = vmatprep.subr.bf16.mxu0 0
    %322 = vmatpush2.bf16.xpose.msra.mxu0 0
    %323 = vmatprep.subr.bf16.mxu0 0
    %324 = vmatpush2.bf16.xpose.msra.mxu0 0
    %325 = vmatprep.subr.bf16.mxu0 0
    %326 = vmatpush2.bf16.xpose.msra.mxu0 0
    %327 = vmatprep.subr.bf16.mxu0 0
    %328 = vmatpush2.bf16.xpose.msra.mxu0 0
    %329 = vmatprep.mubr.bf16.mxu0 0
    %330 = vmatmul.mubr.bf16.gmra.mxu0 %v295
    %v331 = vpop.f32.mrf.mxu0
    %v332 = vadd.f32 0.0, %v331
    %v333 = vpop.f32.mrf.mxu0
    %v334 = vpop.f32.mrf.mxu0
    %v335 = vpop.f32.mrf.mxu0
    %336 = vdwg.mxu0
    %v337 = vtanh.pop %v332
    %v338 = vmul.f32 %v337, 50.0
    %v339 = vmul.f32 %v338, 1.442695
    %v340 = vpow.pop %v339
    %v341 = vsel %vm180, %v340, 0.0
    %v342 = vsel %vm135, %v341, 0.0
    %343 = vadd.xlane.f32.xlu0 %v342
    %v344 = vpop.xlane.xlu0 %343
    %v345 = vrcp.pop %v344
    %v346 = vpack.c.bf16 %v341, %v341
    %v348 = vsel %vm135, %v346, 0
    %350 = vmatprep.subr.bf16.mxu0 0
    %351 = vmatpush1.bf16.msra.mxu0 0
    %352 = vmatprep.subr.bf16.mxu0 0
    %353 = vmatpush1.bf16.msra.mxu0 0
    %354 = vmatprep.subr.bf16.mxu0 0
    %355 = vmatpush1.bf16.msra.mxu0 0
    %356 = vmatprep.subr.bf16.mxu0 0
    %357 = vmatpush1.bf16.msra.mxu0 0
    %358 = vmatprep.subr.bf16.mxu0 0
    %359 = vmatpush1.bf16.msra.mxu0 0
    %360 = vmatprep.subr.bf16.mxu0 0
    %361 = vmatpush1.bf16.msra.mxu0 0
    %362 = vmatprep.subr.bf16.mxu0 0
    %363 = vmatpush1.bf16.msra.mxu0 0
    %364 = vmatprep.subr.bf16.mxu0 0
    %365 = vmatpush1.bf16.msra.mxu0 %v248
    %366 = vmatprep.subr.bf16.mxu0 0
    %367 = vmatpush2.bf16.msra.mxu0 0
    %368 = vmatprep.subr.bf16.mxu0 0
    %369 = vmatpush2.bf16.msra.mxu0 0
    %370 = vmatprep.subr.bf16.mxu0 0
    %371 = vmatpush2.bf16.msra.mxu0 0
    %372 = vmatprep.subr.bf16.mxu0 0
    %373 = vmatpush2.bf16.msra.mxu0 0
    %374 = vmatprep.subr.bf16.mxu0 0
    %375 = vmatpush2.bf16.msra.mxu0 0
    %376 = vmatprep.subr.bf16.mxu0 0
    %377 = vmatpush2.bf16.msra.mxu0 0
    %378 = vmatprep.subr.bf16.mxu0 0
    %379 = vmatpush2.bf16.msra.mxu0 0
    %380 = vmatprep.subr.bf16.mxu0 0
    %381 = vmatpush2.bf16.msra.mxu0 0
    %382 = vmatprep.mubr.bf16.mxu0 0
    %383 = vmatmul.mubr.bf16.gmra.mxu0 %v348
    %v384 = vpop.f32.mrf.mxu0
    %v385 = vadd.f32 0.0, %v384
    %v386 = vpop.f32.mrf.mxu0
    %v387 = vpop.f32.mrf.mxu0
    %v388 = vpop.f32.mrf.mxu0
    %389 = vdwg.mxu0
    %v390 = vmul.f32 %v385, %v345
    %391 = vrot.lane.b32.xlu0 %v173, 96
    %v392 = vpop.permute.xlu0 %391
    %393 = vrot.lane.b32.xlu0 %v174, 48
    %v394 = vpop.permute.xlu0 %393
    %v396 = vsel %vm137, %v392, 0
    %v399 = vsel %vm137, %v394, 0
    %401 = vmatprep.subr.bf16.mxu0 0
    %402 = vmatpush1.bf16.xpose.msra.mxu0 0
    %403 = vmatprep.subr.bf16.mxu0 0
    %404 = vmatpush1.bf16.xpose.msra.mxu0 0
    %405 = vmatprep.subr.bf16.mxu0 0
    %406 = vmatpush1.bf16.xpose.msra.mxu0 0
    %407 = vmatprep.subr.bf16.mxu0 0
    %408 = vmatpush1.bf16.xpose.msra.mxu0 0
    %409 = vmatprep.subr.bf16.mxu0 0
    %410 = vmatpush1.bf16.xpose.msra.mxu0 0
    %411 = vmatprep.subr.bf16.mxu0 0
    %412 = vmatpush1.bf16.xpose.msra.mxu0 0
    %413 = vmatprep.subr.bf16.mxu0 0
    %414 = vmatpush1.bf16.xpose.msra.mxu0 0
    %415 = vmatprep.subr.bf16.mxu0 0
    %416 = vmatpush1.bf16.xpose.msra.mxu0 %v399
    %417 = vmatprep.subr.bf16.mxu0 0
    %418 = vmatpush2.bf16.xpose.msra.mxu0 0
    %419 = vmatprep.subr.bf16.mxu0 0
    %420 = vmatpush2.bf16.xpose.msra.mxu0 0
    %421 = vmatprep.subr.bf16.mxu0 0
    %422 = vmatpush2.bf16.xpose.msra.mxu0 0
    %423 = vmatprep.subr.bf16.mxu0 0
    %424 = vmatpush2.bf16.xpose.msra.mxu0 0
    %425 = vmatprep.subr.bf16.mxu0 0
    %426 = vmatpush2.bf16.xpose.msra.mxu0 0
    %427 = vmatprep.subr.bf16.mxu0 0
    %428 = vmatpush2.bf16.xpose.msra.mxu0 0
    %429 = vmatprep.subr.bf16.mxu0 0
    %430 = vmatpush2.bf16.xpose.msra.mxu0 0
    %431 = vmatprep.subr.bf16.mxu0 0
    %432 = vmatpush2.bf16.xpose.msra.mxu0 0
    %433 = vmatprep.mubr.bf16.mxu0 0
    %434 = vmatmul.mubr.bf16.gmra.mxu0 %v396
    %v435 = vpop.f32.mrf.mxu0
    %v436 = vadd.f32 0.0, %v435
    %v437 = vpop.f32.mrf.mxu0
    %v438 = vpop.f32.mrf.mxu0
    %v439 = vpop.f32.mrf.mxu0
    %440 = vdwg.mxu0
    %v441 = vtanh.pop %v436
    %v442 = vmul.f32 %v441, 50.0
    %v443 = vmul.f32 %v442, 1.442695
    %v444 = vpow.pop %v443
    %v445 = vsel %vm180, %v444, 0.0
    %v446 = vsel %vm135, %v445, 0.0
    %447 = vadd.xlane.f32.xlu0 %v446
    %v448 = vpop.xlane.xlu0 %447
    %v449 = vrcp.pop %v448
    %v450 = vpack.c.bf16 %v445, %v445
    %451 = vrot.lane.b32.xlu0 %v175, 16
    %v452 = vpop.permute.xlu0 %451
    %v454 = vsel %vm135, %v450, 0
    %v457 = vsel %vm246, %v452, 0
    %459 = vmatprep.subr.bf16.mxu0 0
    %460 = vmatpush1.bf16.msra.mxu0 0
    %461 = vmatprep.subr.bf16.mxu0 0
    %462 = vmatpush1.bf16.msra.mxu0 0
    %463 = vmatprep.subr.bf16.mxu0 0
    %464 = vmatpush1.bf16.msra.mxu0 0
    %465 = vmatprep.subr.bf16.mxu0 0
    %466 = vmatpush1.bf16.msra.mxu0 0
    %467 = vmatprep.subr.bf16.mxu0 0
    %468 = vmatpush1.bf16.msra.mxu0 0
    %469 = vmatprep.subr.bf16.mxu0 0
    %470 = vmatpush1.bf16.msra.mxu0 0
    %471 = vmatprep.subr.bf16.mxu0 0
    %472 = vmatpush1.bf16.msra.mxu0 0
    %473 = vmatprep.subr.bf16.mxu0 0
    %474 = vmatpush1.bf16.msra.mxu0 %v457
    %475 = vmatprep.subr.bf16.mxu0 0
    %476 = vmatpush2.bf16.msra.mxu0 0
    %477 = vmatprep.subr.bf16.mxu0 0
    %478 = vmatpush2.bf16.msra.mxu0 0
    %479 = vmatprep.subr.bf16.mxu0 0
    %480 = vmatpush2.bf16.msra.mxu0 0
    %481 = vmatprep.subr.bf16.mxu0 0
    %482 = vmatpush2.bf16.msra.mxu0 0
    %483 = vmatprep.subr.bf16.mxu0 0
    %484 = vmatpush2.bf16.msra.mxu0 0
    %485 = vmatprep.subr.bf16.mxu0 0
    %486 = vmatpush2.bf16.msra.mxu0 0
    %487 = vmatprep.subr.bf16.mxu0 0
    %488 = vmatpush2.bf16.msra.mxu0 0
    %489 = vmatprep.subr.bf16.mxu0 0
    %490 = vmatpush2.bf16.msra.mxu0 0
    %491 = vmatprep.mubr.bf16.mxu0 0
    %492 = vmatmul.mubr.bf16.gmra.mxu0 %v454
    %v493 = vpop.f32.mrf.mxu0
    %v494 = vadd.f32 0.0, %v493
    %v495 = vpop.f32.mrf.mxu0
    %v496 = vpop.f32.mrf.mxu0
    %v497 = vpop.f32.mrf.mxu0
    %498 = vdwg.mxu0
    %v499 = vmul.f32 %v494, %v449
    %500 = vrot.lane.b32.xlu0 %v173, 80
    %v501 = vpop.permute.xlu0 %500
    %v503 = vsel %vm137, %v501, 0
    %505 = vmatprep.subr.bf16.mxu0 0
    %506 = vmatpush1.bf16.xpose.msra.mxu0 0
    %507 = vmatprep.subr.bf16.mxu0 0
    %508 = vmatpush1.bf16.xpose.msra.mxu0 0
    %509 = vmatprep.subr.bf16.mxu0 0
    %510 = vmatpush1.bf16.xpose.msra.mxu0 0
    %511 = vmatprep.subr.bf16.mxu0 0
    %512 = vmatpush1.bf16.xpose.msra.mxu0 0
    %513 = vmatprep.subr.bf16.mxu0 0
    %514 = vmatpush1.bf16.xpose.msra.mxu0 0
    %515 = vmatprep.subr.bf16.mxu0 0
    %516 = vmatpush1.bf16.xpose.msra.mxu0 0
    %517 = vmatprep.subr.bf16.mxu0 0
    %518 = vmatpush1.bf16.xpose.msra.mxu0 0
    %519 = vmatprep.subr.bf16.mxu0 0
    %520 = vmatpush1.bf16.xpose.msra.mxu0 %v399
    %521 = vmatprep.subr.bf16.mxu0 0
    %522 = vmatpush2.bf16.xpose.msra.mxu0 0
    %523 = vmatprep.subr.bf16.mxu0 0
    %524 = vmatpush2.bf16.xpose.msra.mxu0 0
    %525 = vmatprep.subr.bf16.mxu0 0
    %526 = vmatpush2.bf16.xpose.msra.mxu0 0
    %527 = vmatprep.subr.bf16.mxu0 0
    %528 = vmatpush2.bf16.xpose.msra.mxu0 0
    %529 = vmatprep.subr.bf16.mxu0 0
    %530 = vmatpush2.bf16.xpose.msra.mxu0 0
    %531 = vmatprep.subr.bf16.mxu0 0
    %532 = vmatpush2.bf16.xpose.msra.mxu0 0
    %533 = vmatprep.subr.bf16.mxu0 0
    %534 = vmatpush2.bf16.xpose.msra.mxu0 0
    %535 = vmatprep.subr.bf16.mxu0 0
    %536 = vmatpush2.bf16.xpose.msra.mxu0 0
    %537 = vmatprep.mubr.bf16.mxu0 0
    %538 = vmatmul.mubr.bf16.gmra.mxu0 %v503
    %v539 = vpop.f32.mrf.mxu0
    %v540 = vadd.f32 0.0, %v539
    %v541 = vpop.f32.mrf.mxu0
    %v542 = vpop.f32.mrf.mxu0
    %v543 = vpop.f32.mrf.mxu0
    %544 = vdwg.mxu0
    %v545 = vtanh.pop %v540
    %v546 = vmul.f32 %v545, 50.0
    %v547 = vmul.f32 %v546, 1.442695
    %v548 = vpow.pop %v547
    %v549 = vsel %vm180, %v548, 0.0
    %v550 = vsel %vm135, %v549, 0.0
    %551 = vadd.xlane.f32.xlu0 %v550
    %v552 = vpop.xlane.xlu0 %551
    %v553 = vrcp.pop %v552
    %v554 = vpack.c.bf16 %v549, %v549
    %v556 = vsel %vm135, %v554, 0
    %558 = vmatprep.subr.bf16.mxu0 0
    %559 = vmatpush1.bf16.msra.mxu0 0
    %560 = vmatprep.subr.bf16.mxu0 0
    %561 = vmatpush1.bf16.msra.mxu0 0
    %562 = vmatprep.subr.bf16.mxu0 0
    %563 = vmatpush1.bf16.msra.mxu0 0
    %564 = vmatprep.subr.bf16.mxu0 0
    %565 = vmatpush1.bf16.msra.mxu0 0
    %566 = vmatprep.subr.bf16.mxu0 0
    %567 = vmatpush1.bf16.msra.mxu0 0
    %568 = vmatprep.subr.bf16.mxu0 0
    %569 = vmatpush1.bf16.msra.mxu0 0
    %570 = vmatprep.subr.bf16.mxu0 0
    %571 = vmatpush1.bf16.msra.mxu0 0
    %572 = vmatprep.subr.bf16.mxu0 0
    %573 = vmatpush1.bf16.msra.mxu0 %v457
    %574 = vmatprep.subr.bf16.mxu0 0
    %575 = vmatpush2.bf16.msra.mxu0 0
    %576 = vmatprep.subr.bf16.mxu0 0
    %577 = vmatpush2.bf16.msra.mxu0 0
    %578 = vmatprep.subr.bf16.mxu0 0
    %579 = vmatpush2.bf16.msra.mxu0 0
    %580 = vmatprep.subr.bf16.mxu0 0
    %581 = vmatpush2.bf16.msra.mxu0 0
    %582 = vmatprep.subr.bf16.mxu0 0
    %583 = vmatpush2.bf16.msra.mxu0 0
    %584 = vmatprep.subr.bf16.mxu0 0
    %585 = vmatpush2.bf16.msra.mxu0 0
    %586 = vmatprep.subr.bf16.mxu0 0
    %587 = vmatpush2.bf16.msra.mxu0 0
    %588 = vmatprep.subr.bf16.mxu0 0
    %589 = vmatpush2.bf16.msra.mxu0 0
    %590 = vmatprep.mubr.bf16.mxu0 0
    %591 = vmatmul.mubr.bf16.gmra.mxu0 %v556
    %v592 = vpop.f32.mrf.mxu0
    %v593 = vadd.f32 0.0, %v592
    %v594 = vpop.f32.mrf.mxu0
    %v595 = vpop.f32.mrf.mxu0
    %v596 = vpop.f32.mrf.mxu0
    %597 = vdwg.mxu0
    %v598 = vmul.f32 %v593, %v553
    %600 = vrot.lane.b32.xlu0 %v390, 16
    %v601 = vpop.permute.xlu0 %600
    %604 = vrot.lane.b32.xlu0 %v499, 32
    %v605 = vpop.permute.xlu0 %604
    %608 = vrot.lane.b32.xlu0 %v598, 48
    %v609 = vpop.permute.xlu0 %608
    %v611 = vsel %vm137, %v290, %v601
    %v612 = vsel %vm50, %v611, %v605
    %v613 = vsel %vm144, %v612, %v609
    %v614 = vpack.c.bf16 %v613, %v613
    %v615 = vld [vmem:[%s2] sm:$0xf]
    %v616 = vld [vmem:[%s2 + $0x4] sm:$0xf]
    %v617 = vld [vmem:[%s2 + $0x8] sm:$0xf]
    %v618 = vld [vmem:[%s2 + $0xc] sm:$0xf]
    %v619 = vld [vmem:[%s2 + $0x10] sm:$0xf]
    %v620 = vld [vmem:[%s2 + $0x14] sm:$0xf]
    %v621 = vld [vmem:[%s2 + $0x18] sm:$0xf]
    %v622 = vld [vmem:[%s2 + $0x1c] sm:$0xf]
    %v631 = vunpack.c.l.b16 %v615
    %v632 = vunpack.c.l.b16 %v616
    %v633 = vunpack.c.l.b16 %v617
    %v634 = vunpack.c.l.b16 %v618
    %v635 = vunpack.c.l.b16 %v619
    %v636 = vunpack.c.l.b16 %v620
    %v637 = vunpack.c.l.b16 %v621
    %v638 = vunpack.c.l.b16 %v622
    %v639 = vpack.c.b16 %v632, %v631
    %v640 = vpack.c.b16 %v634, %v633
    %v641 = vpack.c.b16 %v636, %v635
    %v642 = vpack.c.b16 %v638, %v637
    %vm647 = vcmask 523264
    %v649 = vsel %vm647, %v614, 0
    %651 = vmatprep.subr.bf16.mxu0 0
    %652 = vmatpush1.bf16.msra.mxu0 0
    %653 = vmatprep.subr.bf16.mxu0 0
    %654 = vmatpush1.bf16.msra.mxu0 0
    %655 = vmatprep.subr.bf16.mxu0 0
    %656 = vmatpush1.bf16.msra.mxu0 0
    %657 = vmatprep.subr.bf16.mxu0 0
    %658 = vmatpush1.bf16.msra.mxu0 0
    %659 = vmatprep.subr.bf16.mxu0 0
    %660 = vmatpush1.bf16.msra.mxu0 %v642
    %661 = vmatprep.subr.bf16.mxu0 0
    %662 = vmatpush1.bf16.msra.mxu0 %v641
    %663 = vmatprep.subr.bf16.mxu0 0
    %664 = vmatpush1.bf16.msra.mxu0 %v640
    %665 = vmatprep.subr.bf16.mxu0 0
    %666 = vmatpush1.bf16.msra.mxu0 %v639
    %667 = vmatprep.subr.bf16.mxu0 0
    %668 = vmatpush2.bf16.msra.mxu0 0
    %669 = vmatprep.subr.bf16.mxu0 0
    %670 = vmatpush2.bf16.msra.mxu0 0
    %671 = vmatprep.subr.bf16.mxu0 0
    %672 = vmatpush2.bf16.msra.mxu0 0
    %673 = vmatprep.subr.bf16.mxu0 0
    %674 = vmatpush2.bf16.msra.mxu0 0
    %675 = vmatprep.subr.bf16.mxu0 0
    %676 = vmatpush2.bf16.msra.mxu0 0
    %677 = vmatprep.subr.bf16.mxu0 0
    %678 = vmatpush2.bf16.msra.mxu0 0
    %679 = vmatprep.subr.bf16.mxu0 0
    %680 = vmatpush2.bf16.msra.mxu0 0
    %681 = vmatprep.subr.bf16.mxu0 0
    %682 = vmatpush2.bf16.msra.mxu0 0
    %683 = vmatprep.mubr.bf16.mxu0 0
    %684 = vmatmul.mubr.bf16.gmra.mxu0 %v649
    %v685 = vpop.f32.mrf.mxu0
    %v686 = vadd.f32 0.0, %v685
    %v687 = vpop.f32.mrf.mxu0
    %v688 = vpop.f32.mrf.mxu0
    %v689 = vpop.f32.mrf.mxu0
    %690 = vdwg.mxu0
    %v691 = vld [vmem:[%s6] sm:$0x1]
    %v692 = vadd.f32 %v691, 1.0
    %v693 = vmul.f32 %v686, %v686
    %v694 = vsel %vm50, %v693, 0.0
    %695 = vadd.xlane.f32.xlu0 %v694
    %v696 = vpop.xlane.xlu0 %695
    %v697 = vmul.f32 %v696, %v54
    %v698 = vadd.f32 %v697, 1e-06
    %v699 = vrsqrt.pop %v698
    %v700 = vmul.f32 %v686, %v699
    %v702 = vlaneseq
    %v703 = vshrl.u32 %v702, 7
    %v704 = vsub.s32 0, %v703
    %v705 = vrot.slane %v692, %v704
    %v707 = vmul.f32 %v700, %v705
    %v708 = vadd.f32 %v46, %v707
    %v709 = vld [vmem:[%s7] sm:$0x1]
    %v710 = vadd.f32 %v709, 1.0
    %v711 = vmul.f32 %v708, %v708
    %v712 = vsel %vm50, %v711, 0.0
    %713 = vadd.xlane.f32.xlu0 %v712
    %v714 = vpop.xlane.xlu0 %713
    %v715 = vmul.f32 %v714, %v54
    %v716 = vadd.f32 %v715, 1e-06
    %v717 = vrsqrt.pop %v716
    %v718 = vmul.f32 %v708, %v717
    %v720 = vlaneseq
    %v721 = vshrl.u32 %v720, 7
    %v722 = vsub.s32 0, %v721
    %v723 = vrot.slane %v710, %v722
    %v725 = vmul.f32 %v718, %v723
    %v726 = vpack.c.bf16 %v725, %v725
    %v727 = vld [vmem:[%s3] sm:$0xf]
    %v728 = vld [vmem:[%s3 + $0x4] sm:$0xf]
    %v729 = vld [vmem:[%s3 + $0x8] sm:$0xf]
    %v730 = vld [vmem:[%s3 + $0xc] sm:$0xf]
    %v735 = vunpack.c.l.b16 %v727
    %v736 = vunpack.c.l.b16 %v728
    %v737 = vunpack.c.l.b16 %v729
    %v738 = vunpack.c.l.b16 %v730
    %v739 = vpack.c.b16 %v736, %v735
    %v740 = vpack.c.b16 %v738, %v737
    %v744 = vsel %vm50, %v726, 0
    %746 = vmatprep.subr.bf16.mxu0 0
    %747 = vmatpush1.bf16.msra.mxu0 0
    %748 = vmatprep.subr.bf16.mxu0 0
    %749 = vmatpush1.bf16.msra.mxu0 0
    %750 = vmatprep.subr.bf16.mxu0 0
    %751 = vmatpush1.bf16.msra.mxu0 0
    %752 = vmatprep.subr.bf16.mxu0 0
    %753 = vmatpush1.bf16.msra.mxu0 0
    %754 = vmatprep.subr.bf16.mxu0 0
    %755 = vmatpush1.bf16.msra.mxu0 0
    %756 = vmatprep.subr.bf16.mxu0 0
    %757 = vmatpush1.bf16.msra.mxu0 0
    %758 = vmatprep.subr.bf16.mxu0 0
    %759 = vmatpush1.bf16.msra.mxu0 %v740
    %760 = vmatprep.subr.bf16.mxu0 0
    %761 = vmatpush1.bf16.msra.mxu0 %v739
    %762 = vmatprep.subr.bf16.mxu0 0
    %763 = vmatpush2.bf16.msra.mxu0 0
    %764 = vmatprep.subr.bf16.mxu0 0
    %765 = vmatpush2.bf16.msra.mxu0 0
    %766 = vmatprep.subr.bf16.mxu0 0
    %767 = vmatpush2.bf16.msra.mxu0 0
    %768 = vmatprep.subr.bf16.mxu0 0
    %769 = vmatpush2.bf16.msra.mxu0 0
    %770 = vmatprep.subr.bf16.mxu0 0
    %771 = vmatpush2.bf16.msra.mxu0 0
    %772 = vmatprep.subr.bf16.mxu0 0
    %773 = vmatpush2.bf16.msra.mxu0 0
    %774 = vmatprep.subr.bf16.mxu0 0
    %775 = vmatpush2.bf16.msra.mxu0 0
    %776 = vmatprep.subr.bf16.mxu0 0
    %777 = vmatpush2.bf16.msra.mxu0 0
    %778 = vmatprep.mubr.bf16.mxu0 0
    %779 = vmatmul.mubr.bf16.gmra.mxu0 %v744
    %v780 = vpop.f32.mrf.mxu0
    %v781 = vadd.f32 0.0, %v780
    %v782 = vpop.f32.mrf.mxu0
    %v783 = vpop.f32.mrf.mxu0
    %v784 = vpop.f32.mrf.mxu0
    %785 = vdwg.mxu0
    %v786 = vmul.f32 %v781, 0.5
    %v787 = vmul.f32 %v781, 0.044715
    %v788 = vmul.f32 %v787, %v781
    %v789 = vmul.f32 %v788, %v781
    %v790 = vadd.f32 %v781, %v789
    %v791 = vmul.f32 %v790, 0.7978846
    %v792 = vtanh.pop %v791
    %v793 = vadd.f32 %v792, 1.0
    %v794 = vmul.f32 %v786, %v793
    %796 = vrot.lane.b32.xlu0 %v781, 64
    %v797 = vpop.permute.xlu0 %796
    %v799 = vmul.f32 %v794, %v797
    %v800 = vpack.c.bf16 %v799, %v799
    %v801 = vld [vmem:[%s4] sm:$0xf]
    %v802 = vld [vmem:[%s4 + $0x4] sm:$0xf]
    %v803 = vld [vmem:[%s4 + $0x8] sm:$0xf]
    %v804 = vld [vmem:[%s4 + $0xc] sm:$0xf]
    %v805 = vld [vmem:[%s4 + $0x10] sm:$0xf]
    %v806 = vld [vmem:[%s4 + $0x14] sm:$0xf]
    %v807 = vld [vmem:[%s4 + $0x18] sm:$0xf]
    %v808 = vld [vmem:[%s4 + $0x1c] sm:$0xf]
    %v817 = vunpack.c.l.b16 %v801
    %v818 = vunpack.c.l.b16 %v802
    %v819 = vunpack.c.l.b16 %v803
    %v820 = vunpack.c.l.b16 %v804
    %v821 = vunpack.c.l.b16 %v805
    %v822 = vunpack.c.l.b16 %v806
    %v823 = vunpack.c.l.b16 %v807
    %v824 = vunpack.c.l.b16 %v808
    %v825 = vpack.c.b16 %v818, %v817
    %v826 = vpack.c.b16 %v820, %v819
    %v827 = vpack.c.b16 %v822, %v821
    %v828 = vpack.c.b16 %v824, %v823
    %v834 = vsel %vm647, %v800, 0
    %836 = vmatprep.subr.bf16.mxu0 0
    %837 = vmatpush1.bf16.msra.mxu0 0
    %838 = vmatprep.subr.bf16.mxu0 0
    %839 = vmatpush1.bf16.msra.mxu0 0
    %840 = vmatprep.subr.bf16.mxu0 0
    %841 = vmatpush1.bf16.msra.mxu0 0
    %842 = vmatprep.subr.bf16.mxu0 0
    %843 = vmatpush1.bf16.msra.mxu0 0
    %844 = vmatprep.subr.bf16.mxu0 0
    %845 = vmatpush1.bf16.msra.mxu0 %v828
    %846 = vmatprep.subr.bf16.mxu0 0
    %847 = vmatpush1.bf16.msra.mxu0 %v827
    %848 = vmatprep.subr.bf16.mxu0 0
    %849 = vmatpush1.bf16.msra.mxu0 %v826
    %850 = vmatprep.subr.bf16.mxu0 0
    %851 = vmatpush1.bf16.msra.mxu0 %v825
    %852 = vmatprep.subr.bf16.mxu0 0
    %853 = vmatpush2.bf16.msra.mxu0 0
    %854 = vmatprep.subr.bf16.mxu0 0
    %855 = vmatpush2.bf16.msra.mxu0 0
    %856 = vmatprep.subr.bf16.mxu0 0
    %857 = vmatpush2.bf16.msra.mxu0 0
    %858 = vmatprep.subr.bf16.mxu0 0
    %859 = vmatpush2.bf16.msra.mxu0 0
    %860 = vmatprep.subr.bf16.mxu0 0
    %861 = vmatpush2.bf16.msra.mxu0 0
    %862 = vmatprep.subr.bf16.mxu0 0
    %863 = vmatpush2.bf16.msra.mxu0 0
    %864 = vmatprep.subr.bf16.mxu0 0
    %865 = vmatpush2.bf16.msra.mxu0 0
    %866 = vmatprep.subr.bf16.mxu0 0
    %867 = vmatpush2.bf16.msra.mxu0 0
    %868 = vmatprep.mubr.bf16.mxu0 0
    %869 = vmatmul.mubr.bf16.gmra.mxu0 %v834
    %v870 = vpop.f32.mrf.mxu0
    %v871 = vadd.f32 0.0, %v870
    %v872 = vpop.f32.mrf.mxu0
    %v873 = vpop.f32.mrf.mxu0
    %v874 = vpop.f32.mrf.mxu0
    %875 = vdwg.mxu0
    %v876 = vld [vmem:[%s8] sm:$0x1]
    %v877 = vadd.f32 %v876, 1.0
    %v878 = vmul.f32 %v871, %v871
    %v879 = vsel %vm50, %v878, 0.0
    %880 = vadd.xlane.f32.xlu0 %v879
    %v881 = vpop.xlane.xlu0 %880
    %v882 = vmul.f32 %v881, %v54
    %v883 = vadd.f32 %v882, 1e-06
    %v884 = vrsqrt.pop %v883
    %v885 = vmul.f32 %v871, %v884
    %v887 = vlaneseq
    %v888 = vshrl.u32 %v887, 7
    %v889 = vsub.s32 0, %v888
    %v890 = vrot.slane %v877, %v889
    %v892 = vmul.f32 %v885, %v890
    %v893 = vadd.f32 %v708, %v892
    %894 = vst.msk [vmem:[#allocation2] sm:$0xff] %vm50, %v893
    // Predicated region
    $region54: #{tpu_custom_call.1} parent=1 // pred_check
      _
    $region55: #{tpu_custom_call.1} parent=1 // pred_check_branch
      %896 = sbr.rel (0) target = $region57
    $region56: #{tpu_custom_call.1} parent=1 // pred_region
      %s898 = ssub.s32 128, 128
      %899 = vsyncadd [#allocation3], %s898
      %s901 = sshll.u32 [#allocation2], 4
      %s902 = int_to_ptr.vmem [resolvable:$true] %s901
      %904 = dma.vmem_to_hbm [thread:$0]  %s902, 128, %s13, [#allocation3]
    $region57: #{tpu_custom_call.1} parent=1 // pred_fallthru
      _
    // Predicated region
    $region58: #{tpu_custom_call.1} parent=1 // pred_check
      _
    $region59: #{tpu_custom_call.1} parent=1 // pred_check_branch
      %906 = sbr.rel (0) target = $region61
    $region60: #{tpu_custom_call.1} parent=1 // pred_region
      %907 = dma.done [#allocation3], 128
    $region61: #{tpu_custom_call.1} parent=1 // pred_fallthru
      _
    %908 = vsyncpa [#allocation3], 1

</llo_original>
